<compile_context>
chip_gen: v5e
topology: v5e:2x2
jax: 0.10.0
libtpu: 0.0.40
codegen_flags: <defaults>
</compile_context>

<pallas_src>
import jax
import jax.numpy as jnp
from jax import lax
from jax.experimental import pallas as pl
from jax.experimental.pallas import tpu as pltpu

MXU_DTYPE = jnp.float32   # jnp.bfloat16 => single-pass MXU, ~1e-3+ relative error


def _flat_to_hw(lane, H, W):
    """Per-lane (h, w) from flat index n*H*W + h*W + w (H, W are Python ints)."""
    if (W & (W - 1)) == 0:                      # power-of-two fast path: bit ops
        w_idx = lane & (W - 1)
        hw = lane >> (W.bit_length() - 1)
    else:
        w_idx = lane % W
        hw = lane // W
    if (H & (H - 1)) == 0:
        h_idx = hw & (H - 1)
    else:
        h_idx = hw % H
    return h_idx, w_idx


def _make_cnn_layer_kernel(N, H, W, Cin_p, Cout_p, eps, slope):
    NHW = N * H * W
    inv_count = 1.0 / float(NHW)

    def kernel(x_ref, w_ref, gamma_ref, beta_ref, o_ref, xs_ref):
        # x_ref     : (Cin_p, NHW)       f32  channel-major, lane-dense slab
        # w_ref     : (Cout_p, 9*Cin_p)  f32  tap-stacked conv weights
        # gamma/beta: (Cout_p, 1)        f32  BN affine params
        # o_ref     : (Cout_p, NHW)      f32  output slab
        # xs_ref    : (9*Cin_p, NHW)     f32  VMEM scratch: stacked tap operands
        x = x_ref[...]

        # In-kernel halo masks from iota (no HBM mask table).
        lane = lax.broadcasted_iota(jnp.int32, (Cin_p, NHW), 1)
        h_idx, w_idx = _flat_to_hw(lane, H, W)

        # Stack the 9 taps into one (9*Cin_p, NHW) MXU operand.
        for dy in range(3):
            for dx in range(3):
                tap = dy * 3 + dx
                oy, ox = dy - 1, dx - 1
                if oy == 0 and ox == 0:
                    block = x                              # center: no shift/halo
                else:
                    offset = oy * W + ox                   # flat-index shift
                    block = pltpu.roll(x, shift=(-offset) % NHW, axis=1)
                    conds = []
                    if oy == -1:
                        conds.append(h_idx >= 1)
                    elif oy == 1:
                        conds.append(h_idx <= H - 2)
                    if ox == -1:
                        conds.append(w_idx >= 1)
                    elif ox == 1:
                        conds.append(w_idx <= W - 2)
                    valid = conds[0]
                    for c in conds[1:]:
                        valid = jnp.logical_and(valid, c)
                    block = jnp.where(valid, block, 0.0)   # zero out-of-image lanes
                xs_ref[tap * Cin_p:(tap + 1) * Cin_p, :] = block

        # One fused K = 9*Cin_p MXU matmul.  Conv bias omitted on purpose:
        # train-mode BN's mean subtraction cancels a per-channel constant.
        acc = jnp.dot(w_ref[...].astype(MXU_DTYPE), xs_ref[...].astype(MXU_DTYPE),
                      preferred_element_type=jnp.float32)

        # BatchNorm2d (biased batch stats over N*H*W), folded to one mul-add.
        s1 = jnp.sum(acc, axis=1, keepdims=True)
        s2 = jnp.sum(acc * acc, axis=1, keepdims=True)
        mean = s1 * inv_count
        var = s2 * inv_count - mean * mean
        scale = gamma_ref[...] * lax.rsqrt(var + eps)        # EUP slot
        shift = beta_ref[...] - mean * scale
        y = acc * scale + shift

        # LeakyReLU(0.2) + one unmasked lane-dense store.
        o_ref[...] = jnp.where(y > 0, y, slope * y).astype(o_ref.dtype)

    return kernel


def cnn_layer_forward_cm(x_cm, w, gamma, beta, *, N, H, W, eps=1e-5, slope=0.2):
    """Channel-major entry point: x_cm (Cin, N*H*W) -> (Cout, N*H*W).

    Chain this between consecutive cnn_layer calls to keep activations in the
    lane-dense layout (no per-layer NCHW transposes).  The Conv2d bias is not
    an input: train-mode BatchNorm cancels it exactly.
    """
    Cin, NHW = x_cm.shape
    assert NHW == N * H * W
    Cout = w.shape[0]
    Cin_p = -(-Cin // 8) * 8        # pad GEMM contraction sub-dim to a sublane tile
    Cout_p = -(-Cout // 8) * 8      # pad output channels to a sublane tile

    x2d = jnp.pad(x_cm.astype(jnp.float32), ((0, Cin_p - Cin), (0, 0)))
    # (Cout, Cin, 3, 3) -> (9, Cout, Cin_p) -> (Cout_p, 9*Cin_p), tap-major cols.
    w_tap = w.astype(jnp.float32).transpose(2, 3, 0, 1).reshape(9, Cout, Cin)
    w_tap = jnp.pad(w_tap, ((0, 0), (0, 0), (0, Cin_p - Cin)))
    w_pk = jnp.pad(w_tap.transpose(1, 0, 2).reshape(Cout, 9 * Cin_p),
                   ((0, Cout_p - Cout), (0, 0)))
    g2 = jnp.pad(gamma.astype(jnp.float32), (0, Cout_p - Cout)).reshape(Cout_p, 1)
    be2 = jnp.pad(beta.astype(jnp.float32), (0, Cout_p - Cout)).reshape(Cout_p, 1)

    kernel = _make_cnn_layer_kernel(N, H, W, Cin_p, Cout_p, eps, slope)
    out = pl.pallas_call(
        kernel,
        out_shape=jax.ShapeDtypeStruct((Cout_p, NHW), jnp.float32),
        in_specs=[pl.BlockSpec(memory_space=pltpu.MemorySpace.VMEM)] * 4,
        out_specs=pl.BlockSpec(memory_space=pltpu.MemorySpace.VMEM),
        scratch_shapes=[pltpu.VMEM((9 * Cin_p, NHW), jnp.float32)],
        # Whole-problem-resident design; raise scoped VMEM (v5e default 16 MiB)
        # and leave headroom.  Larger shapes should instead tile Cout on a
        # ("parallel",) grid axis (also the v7x second-TensorCore lever).
        compiler_params=pltpu.CompilerParams(vmem_limit_bytes=32 * 1024 * 1024),
    )(x2d, w_pk, g2, be2)
    return out[:Cout] if Cout_p != Cout else out


def cnn_layer_forward(x, w, b, gamma, beta, *, eps=1e-5, slope=0.2):
    """PyTorch-layout wrapper: x (N, Cin, H, W) -> (N, Cout, H, W).

    `b` (Conv2d bias) is accepted for API parity but never enters the kernel:
    BN's mean subtraction cancels it exactly.  NCHW <-> (C, NHW) conversion
    happens only here (network boundary).
    """
    del b
    N, Cin, H, W = x.shape
    Cout = w.shape[0]
    x_cm = x.astype(jnp.float32).transpose(1, 0, 2, 3).reshape(Cin, N * H * W)
    out_cm = cnn_layer_forward_cm(x_cm, w, gamma, beta, N=N, H=H, W=W,
                                  eps=eps, slope=slope)
    return out_cm.reshape(Cout, N, H, W).transpose(1, 0, 2, 3)


def _reference_forward(x, w, b, gamma, beta, eps=1e-5, slope=0.2):
    y = lax.conv_general_dilated(
        x, w, window_strides=(1, 1), padding=((1, 1), (1, 1)),
        dimension_numbers=("NCHW", "OIHW", "NCHW"))
    y = y + b[None, :, None, None]
    mean = jnp.mean(y, axis=(0, 2, 3), keepdims=True)
    var = jnp.mean((y - mean) ** 2, axis=(0, 2, 3), keepdims=True)
    y = (y - mean) / jnp.sqrt(var + eps) * gamma[None, :, None, None] \
        + beta[None, :, None, None]
    return jnp.where(y > 0, y, slope * y)


if __name__ == "__main__":
    N, Cin, Cout, H, W = 2, 4, 8, 16, 16

    key = jax.random.PRNGKey(0)
    kx, kw, kb, kg, kbeta = jax.random.split(key, 5)
    x = jax.random.normal(kx, (N, Cin, H, W), dtype=jnp.float32)
    # Deterministic synthetic parameters (Conv2d weight/bias, BatchNorm affine).
    w = jax.random.normal(kw, (Cout, Cin, 3, 3), dtype=jnp.float32) * 0.2
    b = jax.random.normal(kb, (Cout,), dtype=jnp.float32) * 0.1
    gamma = 1.0 + 0.1 * jax.random.normal(kg, (Cout,), dtype=jnp.float32)
    beta = 0.1 * jax.random.normal(kbeta, (Cout,), dtype=jnp.float32)

    fwd = jax.jit(cnn_layer_forward)      # fuses the layout glue with the kernel call
    out = jax.block_until_ready(fwd(x, w, b, gamma, beta))

    ref = jax.block_until_ready(_reference_forward(x, w, b, gamma, beta))
    assert out.shape == (N, Cout, H, W)
    assert jnp.allclose(out, ref, atol=1e-3, rtol=1e-3), \
        f"max abs err {jnp.max(jnp.abs(out - ref))}"

    print("KERNEL_OK")
</pallas_src>

<mosaic_0001>
module attributes {stable_mosaic.version = 11 : i64} {
  func.func @kernel(%arg0: memref<8x512xf32, #tpu.memory_space<vmem>>, %arg1: memref<8x72xf32, #tpu.memory_space<vmem>>, %arg2: memref<8x1xf32, #tpu.memory_space<vmem>>, %arg3: memref<8x1xf32, #tpu.memory_space<vmem>>, %arg4: memref<8x512xf32, #tpu.memory_space<vmem>>, %arg5: memref<72x512xf32, #tpu.memory_space<vmem>>) attributes {dimension_semantics = [], scalar_prefetch = 0 : i64, scratch_operands = 1 : i64, tpu.core_type = #tpu.core_type<tc>} {
    %c0 = arith.constant 0 : index
    %c0_0 = arith.constant 0 : index
    %0 = vector.load %arg0[%c0, %c0_0] : memref<8x512xf32, #tpu.memory_space<vmem>>, vector<8x512xf32>
    %1 = tpu.iota {dimensions = array<i32: 1>} : vector<8x512xi32>
    %c15_i32 = arith.constant 15 : i32
    %2 = vector.broadcast %c15_i32 : i32 to vector<8x512xi32>
    %3 = arith.andi %1, %2 : vector<8x512xi32>
    %c4_i32 = arith.constant 4 : i32
    %4 = vector.broadcast %c4_i32 : i32 to vector<8x512xi32>
    %5 = arith.shrsi %1, %4 : vector<8x512xi32>
    %c15_i32_1 = arith.constant 15 : i32
    %6 = vector.broadcast %c15_i32_1 : i32 to vector<8x512xi32>
    %7 = arith.andi %5, %6 : vector<8x512xi32>
    %c17_i32 = arith.constant 17 : i32
    %8 = tpu.dynamic_rotate %0 by %c17_i32 dim 1 : vector<8x512xf32>, i32 -> vector<8x512xf32>
    %c1_i32 = arith.constant 1 : i32
    %9 = vector.broadcast %c1_i32 : i32 to vector<8x512xi32>
    %10 = arith.cmpi sge, %7, %9 : vector<8x512xi32>
    %c1_i32_2 = arith.constant 1 : i32
    %11 = vector.broadcast %c1_i32_2 : i32 to vector<8x512xi32>
    %12 = arith.cmpi sge, %3, %11 : vector<8x512xi32>
    %13 = arith.andi %10, %12 : vector<8x512xi1>
    %cst = arith.constant 0.000000e+00 : f32
    %14 = vector.broadcast %cst : f32 to vector<8x512xf32>
    %15 = arith.select %13, %8, %14 : vector<8x512xi1>, vector<8x512xf32>
    %c0_3 = arith.constant 0 : index
    %c0_4 = arith.constant 0 : index
    %16 = vector.load %arg5[%c0_3, %c0_4] : memref<72x512xf32, #tpu.memory_space<vmem>>, vector<8x512xf32>
    tpu.vector_store %arg5[%c0_3, %c0_4], %15 {strides = array<i32>} : memref<72x512xf32, #tpu.memory_space<vmem>>, vector<8x512xf32>,
    %c16_i32 = arith.constant 16 : i32
    %17 = tpu.dynamic_rotate %0 by %c16_i32 dim 1 : vector<8x512xf32>, i32 -> vector<8x512xf32>
    %c1_i32_5 = arith.constant 1 : i32
    %18 = vector.broadcast %c1_i32_5 : i32 to vector<8x512xi32>
    %19 = arith.cmpi sge, %7, %18 : vector<8x512xi32>
    %cst_6 = arith.constant 0.000000e+00 : f32
    %20 = vector.broadcast %cst_6 : f32 to vector<8x512xf32>
    %21 = arith.select %19, %17, %20 : vector<8x512xi1>, vector<8x512xf32>
    %c8 = arith.constant 8 : index
    %c0_7 = arith.constant 0 : index
    %22 = vector.load %arg5[%c8, %c0_7] : memref<72x512xf32, #tpu.memory_space<vmem>>, vector<8x512xf32>
    tpu.vector_store %arg5[%c8, %c0_7], %21 {strides = array<i32>} : memref<72x512xf32, #tpu.memory_space<vmem>>, vector<8x512xf32>,
    %c15_i32_8 = arith.constant 15 : i32
    %23 = tpu.dynamic_rotate %0 by %c15_i32_8 dim 1 : vector<8x512xf32>, i32 -> vector<8x512xf32>
    %c1_i32_9 = arith.constant 1 : i32
    %24 = vector.broadcast %c1_i32_9 : i32 to vector<8x512xi32>
    %25 = arith.cmpi sge, %7, %24 : vector<8x512xi32>
    %c14_i32 = arith.constant 14 : i32
    %26 = vector.broadcast %c14_i32 : i32 to vector<8x512xi32>
    %27 = arith.cmpi sle, %3, %26 : vector<8x512xi32>
    %28 = arith.andi %25, %27 : vector<8x512xi1>
    %cst_10 = arith.constant 0.000000e+00 : f32
    %29 = vector.broadcast %cst_10 : f32 to vector<8x512xf32>
    %30 = arith.select %28, %23, %29 : vector<8x512xi1>, vector<8x512xf32>
    %c16 = arith.constant 16 : index
    %c0_11 = arith.constant 0 : index
    %31 = vector.load %arg5[%c16, %c0_11] : memref<72x512xf32, #tpu.memory_space<vmem>>, vector<8x512xf32>
    tpu.vector_store %arg5[%c16, %c0_11], %30 {strides = array<i32>} : memref<72x512xf32, #tpu.memory_space<vmem>>, vector<8x512xf32>,
    %c1_i32_12 = arith.constant 1 : i32
    %32 = tpu.dynamic_rotate %0 by %c1_i32_12 dim 1 : vector<8x512xf32>, i32 -> vector<8x512xf32>
    %c1_i32_13 = arith.constant 1 : i32
    %33 = vector.broadcast %c1_i32_13 : i32 to vector<8x512xi32>
    %34 = arith.cmpi sge, %3, %33 : vector<8x512xi32>
    %cst_14 = arith.constant 0.000000e+00 : f32
    %35 = vector.broadcast %cst_14 : f32 to vector<8x512xf32>
    %36 = arith.select %34, %32, %35 : vector<8x512xi1>, vector<8x512xf32>
    %c24 = arith.constant 24 : index
    %c0_15 = arith.constant 0 : index
    %37 = vector.load %arg5[%c24, %c0_15] : memref<72x512xf32, #tpu.memory_space<vmem>>, vector<8x512xf32>
    tpu.vector_store %arg5[%c24, %c0_15], %36 {strides = array<i32>} : memref<72x512xf32, #tpu.memory_space<vmem>>, vector<8x512xf32>,
    %c32 = arith.constant 32 : index
    %c0_16 = arith.constant 0 : index
    %38 = vector.load %arg5[%c32, %c0_16] : memref<72x512xf32, #tpu.memory_space<vmem>>, vector<8x512xf32>
    tpu.vector_store %arg5[%c32, %c0_16], %0 {strides = array<i32>} : memref<72x512xf32, #tpu.memory_space<vmem>>, vector<8x512xf32>,
    %c511_i32 = arith.constant 511 : i32
    %39 = tpu.dynamic_rotate %0 by %c511_i32 dim 1 : vector<8x512xf32>, i32 -> vector<8x512xf32>
    %c14_i32_17 = arith.constant 14 : i32
    %40 = vector.broadcast %c14_i32_17 : i32 to vector<8x512xi32>
    %41 = arith.cmpi sle, %3, %40 : vector<8x512xi32>
    %cst_18 = arith.constant 0.000000e+00 : f32
    %42 = vector.broadcast %cst_18 : f32 to vector<8x512xf32>
    %43 = arith.select %41, %39, %42 : vector<8x512xi1>, vector<8x512xf32>
    %c40 = arith.constant 40 : index
    %c0_19 = arith.constant 0 : index
    %44 = vector.load %arg5[%c40, %c0_19] : memref<72x512xf32, #tpu.memory_space<vmem>>, vector<8x512xf32>
    tpu.vector_store %arg5[%c40, %c0_19], %43 {strides = array<i32>} : memref<72x512xf32, #tpu.memory_space<vmem>>, vector<8x512xf32>,
    %c497_i32 = arith.constant 497 : i32
    %45 = tpu.dynamic_rotate %0 by %c497_i32 dim 1 : vector<8x512xf32>, i32 -> vector<8x512xf32>
    %c14_i32_20 = arith.constant 14 : i32
    %46 = vector.broadcast %c14_i32_20 : i32 to vector<8x512xi32>
    %47 = arith.cmpi sle, %7, %46 : vector<8x512xi32>
    %c1_i32_21 = arith.constant 1 : i32
    %48 = vector.broadcast %c1_i32_21 : i32 to vector<8x512xi32>
    %49 = arith.cmpi sge, %3, %48 : vector<8x512xi32>
    %50 = arith.andi %47, %49 : vector<8x512xi1>
    %cst_22 = arith.constant 0.000000e+00 : f32
    %51 = vector.broadcast %cst_22 : f32 to vector<8x512xf32>
    %52 = arith.select %50, %45, %51 : vector<8x512xi1>, vector<8x512xf32>
    %c48 = arith.constant 48 : index
    %c0_23 = arith.constant 0 : index
    %53 = vector.load %arg5[%c48, %c0_23] : memref<72x512xf32, #tpu.memory_space<vmem>>, vector<8x512xf32>
    tpu.vector_store %arg5[%c48, %c0_23], %52 {strides = array<i32>} : memref<72x512xf32, #tpu.memory_space<vmem>>, vector<8x512xf32>,
    %c496_i32 = arith.constant 496 : i32
    %54 = tpu.dynamic_rotate %0 by %c496_i32 dim 1 : vector<8x512xf32>, i32 -> vector<8x512xf32>
    %c14_i32_24 = arith.constant 14 : i32
    %55 = vector.broadcast %c14_i32_24 : i32 to vector<8x512xi32>
    %56 = arith.cmpi sle, %7, %55 : vector<8x512xi32>
    %cst_25 = arith.constant 0.000000e+00 : f32
    %57 = vector.broadcast %cst_25 : f32 to vector<8x512xf32>
    %58 = arith.select %56, %54, %57 : vector<8x512xi1>, vector<8x512xf32>
    %c56 = arith.constant 56 : index
    %c0_26 = arith.constant 0 : index
    %59 = vector.load %arg5[%c56, %c0_26] : memref<72x512xf32, #tpu.memory_space<vmem>>, vector<8x512xf32>
    tpu.vector_store %arg5[%c56, %c0_26], %58 {strides = array<i32>} : memref<72x512xf32, #tpu.memory_space<vmem>>, vector<8x512xf32>,
    %c495_i32 = arith.constant 495 : i32
    %60 = tpu.dynamic_rotate %0 by %c495_i32 dim 1 : vector<8x512xf32>, i32 -> vector<8x512xf32>
    %c14_i32_27 = arith.constant 14 : i32
    %61 = vector.broadcast %c14_i32_27 : i32 to vector<8x512xi32>
    %62 = arith.cmpi sle, %7, %61 : vector<8x512xi32>
    %c14_i32_28 = arith.constant 14 : i32
    %63 = vector.broadcast %c14_i32_28 : i32 to vector<8x512xi32>
    %64 = arith.cmpi sle, %3, %63 : vector<8x512xi32>
    %65 = arith.andi %62, %64 : vector<8x512xi1>
    %cst_29 = arith.constant 0.000000e+00 : f32
    %66 = vector.broadcast %cst_29 : f32 to vector<8x512xf32>
    %67 = arith.select %65, %60, %66 : vector<8x512xi1>, vector<8x512xf32>
    %c64 = arith.constant 64 : index
    %c0_30 = arith.constant 0 : index
    %68 = vector.load %arg5[%c64, %c0_30] : memref<72x512xf32, #tpu.memory_space<vmem>>, vector<8x512xf32>
    tpu.vector_store %arg5[%c64, %c0_30], %67 {strides = array<i32>} : memref<72x512xf32, #tpu.memory_space<vmem>>, vector<8x512xf32>,
    %c0_31 = arith.constant 0 : index
    %c0_32 = arith.constant 0 : index
    %69 = vector.load %arg1[%c0_31, %c0_32] : memref<8x72xf32, #tpu.memory_space<vmem>>, vector<8x72xf32>
    %c0_33 = arith.constant 0 : index
    %c0_34 = arith.constant 0 : index
    %70 = vector.load %arg5[%c0_33, %c0_34] : memref<72x512xf32, #tpu.memory_space<vmem>>, vector<72x512xf32>
    %cst_35 = arith.constant dense<0.000000e+00> : vector<8x512xf32>
    %71 = tpu.matmul %69, %70, %cst_35 {dimension_numbers = #tpu.dot_dimension_numbers<[1], [0], [0], [1], [0, 0, 1, 1], [], []>} : vector<8x72xf32>, vector<72x512xf32>, vector<8x512xf32> -> vector<8x512xf32>
    %cst_36 = arith.constant dense<0.000000e+00> : vector<8xf32>
    %72 = vector.multi_reduction <add>, %71, %cst_36 [1] : vector<8x512xf32> to vector<8xf32>
    %73 = vector.shape_cast %72 : vector<8xf32> to vector<8x1xf32>
    %74 = arith.mulf %71, %71 : vector<8x512xf32>
    %cst_37 = arith.constant dense<0.000000e+00> : vector<8xf32>
    %75 = vector.multi_reduction <add>, %74, %cst_37 [1] : vector<8x512xf32> to vector<8xf32>
    %76 = vector.shape_cast %75 : vector<8xf32> to vector<8x1xf32>
    %cst_38 = arith.constant 0.001953125 : f32
    %77 = vector.broadcast %cst_38 : f32 to vector<8x1xf32>
    %78 = arith.mulf %73, %77 : vector<8x1xf32>
    %cst_39 = arith.constant 0.001953125 : f32
    %79 = vector.broadcast %cst_39 : f32 to vector<8x1xf32>
    %80 = arith.mulf %76, %79 : vector<8x1xf32>
    %81 = arith.mulf %78, %78 : vector<8x1xf32>
    %82 = arith.subf %80, %81 : vector<8x1xf32>
    %c0_40 = arith.constant 0 : index
    %c0_41 = arith.constant 0 : index
    %83 = vector.load %arg2[%c0_40, %c0_41] : memref<8x1xf32, #tpu.memory_space<vmem>>, vector<8x1xf32>
    %cst_42 = arith.constant 9.99999974E-6 : f32
    %84 = vector.broadcast %cst_42 : f32 to vector<8x1xf32>
    %85 = arith.addf %82, %84 : vector<8x1xf32>
    %86 = math.rsqrt %85 : vector<8x1xf32>
    %87 = arith.mulf %83, %86 : vector<8x1xf32>
    %c0_43 = arith.constant 0 : index
    %c0_44 = arith.constant 0 : index
    %88 = vector.load %arg3[%c0_43, %c0_44] : memref<8x1xf32, #tpu.memory_space<vmem>>, vector<8x1xf32>
    %89 = arith.mulf %78, %87 : vector<8x1xf32>
    %90 = arith.subf %88, %89 : vector<8x1xf32>
    %91 = vector.broadcast %87 : vector<8x1xf32> to vector<8x512xf32>
    %92 = arith.mulf %71, %91 : vector<8x512xf32>
    %93 = vector.broadcast %90 : vector<8x1xf32> to vector<8x512xf32>
    %94 = arith.addf %92, %93 : vector<8x512xf32>
    %cst_45 = arith.constant 0.000000e+00 : f32
    %95 = vector.broadcast %cst_45 : f32 to vector<8x512xf32>
    %96 = arith.cmpf ogt, %94, %95 : vector<8x512xf32>
    %cst_46 = arith.constant 2.000000e-01 : f32
    %97 = vector.broadcast %cst_46 : f32 to vector<8x512xf32>
    %98 = arith.mulf %97, %94 : vector<8x512xf32>
    %99 = arith.select %96, %94, %98 : vector<8x512xi1>, vector<8x512xf32>
    %c0_47 = arith.constant 0 : index
    %c0_48 = arith.constant 0 : index
    %100 = vector.load %arg4[%c0_47, %c0_48] : memref<8x512xf32, #tpu.memory_space<vmem>>, vector<8x512xf32>
    tpu.vector_store %arg4[%c0_47, %c0_48], %99 {strides = array<i32>} : memref<8x512xf32, #tpu.memory_space<vmem>>, vector<8x512xf32>,
    return
  }
}

</mosaic_0001>

<llo_original>
// kernel: cnn_layer_forward.1
$region0: #{cnn_layer_forward.1}
  #allocation0 [shape = 'u32[]', space=smem, size = 0x4, offset = 0x4, fixed_abs, tag = 'smem constant byte address 0x4 - core index']
  #allocation1 [shape = 'u32[72,128]{1,0:T(1,128)}', space=vmem, size = 0x9000, scoped, tag = 'internal scratch']
  #allocation2 [shape = 'f32[72,512]{1,0:T(8,128)}', space=vmem, size = 0x24000, scoped, tag = 'scratch operand']
  %s0 = inlined_call_operand.vmem [shape: f32[8,512], index: 0, kind: input, shape index: {}]
  %s1 = inlined_call_operand.vmem [shape: f32[8,72], index: 1, kind: input, shape index: {}]
  %s2 = inlined_call_operand.vmem [shape: f32[8,1], index: 2, kind: input, shape index: {}]
  %s3 = inlined_call_operand.vmem [shape: f32[8,1], index: 3, kind: input, shape index: {}]
  %s4 = inlined_call_operand.vmem [shape: f32[8,512], index: 4, kind: output, shape index: {}]
  %s5 = sld [smem:[#allocation0]]
  $region26: #{cnn_layer_forward.1} parent=0
    _
  %s7 = ssub.s32 1, %s5
  %s8 = scalar_select 0, %s7, %s5
  // Predicated region
  $region2: #{cnn_layer_forward.1} parent=0 // pred_check
    _
  $region3: #{cnn_layer_forward.1} parent=0 // pred_check_branch
    %10 = sbr.rel (0) target = $region5
  $region4: #{cnn_layer_forward.1} parent=0 // pred_region
    _
  $region5: #{cnn_layer_forward.1} parent=0 // pred_fallthru
    _
  // Predicated region
  $region6: #{cnn_layer_forward.1} parent=0 // pred_check
    _
  $region7: #{cnn_layer_forward.1} parent=0 // pred_check_branch
    %12 = sbr.rel (0) target = $region9
  $region8: #{cnn_layer_forward.1} parent=0 // pred_region
    _
  $region9: #{cnn_layer_forward.1} parent=0 // pred_fallthru
    _
  // Predicated region
  $region10: #{cnn_layer_forward.1} parent=0 // pred_check
    _
  $region11: #{cnn_layer_forward.1} parent=0 // pred_check_branch
    %14 = sbr.rel (0) target = $region13
  $region12: #{cnn_layer_forward.1} parent=0 // pred_region
    _
  $region13: #{cnn_layer_forward.1} parent=0 // pred_fallthru
    _
  // Predicated region
  $region14: #{cnn_layer_forward.1} parent=0 // pred_check
    _
  $region15: #{cnn_layer_forward.1} parent=0 // pred_check_branch
    %16 = sbr.rel (0) target = $region17
  $region16: #{cnn_layer_forward.1} parent=0 // pred_region
    _
  $region17: #{cnn_layer_forward.1} parent=0 // pred_fallthru
    _
  %v17 = vld [vmem:[%s0] sm:$0xff]
  %v18 = vld [vmem:[%s0 + $0x8] sm:$0xff]
  %v19 = vld [vmem:[%s0 + $0x10] sm:$0xff]
  %v20 = vld [vmem:[%s0 + $0x18] sm:$0xff]
  %v21 = vlaneseq
  %v22 = vand.u32 %v21, 127
  %v23 = vadd.s32 %v22, 128
  %v24 = vadd.s32 %v22, 256
  %v25 = vadd.s32 %v22, 384
  %v26 = vand.u32 %v22, 15
  %v27 = vand.u32 %v23, 15
  %v28 = vand.u32 %v24, 15
  %v29 = vand.u32 %v25, 15
  %v30 = vshra.s32 %v22, 4
  %v31 = vshra.s32 %v23, 4
  %v32 = vshra.s32 %v24, 4
  %v33 = vshra.s32 %v25, 4
  %v34 = vand.u32 %v30, 15
  %v35 = vand.u32 %v31, 15
  %v36 = vand.u32 %v32, 15
  %v37 = vand.u32 %v33, 15
  %38 = vrot.lane.b32.xlu0 %v17, 17
  %v39 = vpop.permute.xlu0 %38
  %40 = vrot.lane.b32.xlu0 %v18, 17
  %v41 = vpop.permute.xlu0 %40
  %42 = vrot.lane.b32.xlu0 %v19, 17
  %v43 = vpop.permute.xlu0 %42
  %44 = vrot.lane.b32.xlu0 %v20, 17
  %v45 = vpop.permute.xlu0 %44
  %vm46 = vcmp.lt.s32.totalorder %v22, 17
  %v47 = vsel %vm46, %v43, %v45
  %v48 = vsel %vm46, %v41, %v43
  %v49 = vsel %vm46, %v39, %v41
  %v50 = vsel %vm46, %v45, %v39
  %vm51 = vcmp.ge.s32.totalorder %v34, 1
  %vm52 = vcmp.ge.s32.totalorder %v35, 1
  %vm53 = vcmp.ge.s32.totalorder %v36, 1
  %vm54 = vcmp.ge.s32.totalorder %v37, 1
  %vm55 = vcmp.ge.s32.totalorder %v26, 1
  %vm56 = vcmp.ge.s32.totalorder %v27, 1
  %vm57 = vcmp.ge.s32.totalorder %v28, 1
  %vm58 = vcmp.ge.s32.totalorder %v29, 1
  %vm59 = vmand %vm51, %vm55
  %vm60 = vmand %vm52, %vm56
  %vm61 = vmand %vm53, %vm57
  %vm62 = vmand %vm54, %vm58
  %v63 = vsel %vm59, %v50, 0.0
  %v64 = vsel %vm60, %v49, 0.0
  %v65 = vsel %vm61, %v48, 0.0
  %v66 = vsel %vm62, %v47, 0.0
  %67 = vst [vmem:[#allocation2] sm:$0xff] %v63
  %68 = vst [vmem:[#allocation2 + $0x8] sm:$0xff] %v64
  %69 = vst [vmem:[#allocation2 + $0x10] sm:$0xff] %v65
  %70 = vst [vmem:[#allocation2 + $0x18] sm:$0xff] %v66
  %71 = vrot.lane.b32.xlu0 %v17, 16
  %v72 = vpop.permute.xlu0 %71
  %73 = vrot.lane.b32.xlu0 %v18, 16
  %v74 = vpop.permute.xlu0 %73
  %75 = vrot.lane.b32.xlu0 %v19, 16
  %v76 = vpop.permute.xlu0 %75
  %77 = vrot.lane.b32.xlu0 %v20, 16
  %v78 = vpop.permute.xlu0 %77
  %vm79 = vcmp.lt.s32.totalorder %v22, 16
  %v80 = vsel %vm79, %v76, %v78
  %v81 = vsel %vm79, %v74, %v76
  %v82 = vsel %vm79, %v72, %v74
  %v83 = vsel %vm79, %v78, %v72
  %v84 = vsel %vm51, %v83, 0.0
  %v85 = vsel %vm52, %v82, 0.0
  %v86 = vsel %vm53, %v81, 0.0
  %v87 = vsel %vm54, %v80, 0.0
  %88 = vst [vmem:[#allocation2 + $0x20] sm:$0xff] %v84
  %89 = vst [vmem:[#allocation2 + $0x28] sm:$0xff] %v85
  %90 = vst [vmem:[#allocation2 + $0x30] sm:$0xff] %v86
  %91 = vst [vmem:[#allocation2 + $0x38] sm:$0xff] %v87
  %92 = vrot.lane.b32.xlu0 %v17, 15
  %v93 = vpop.permute.xlu0 %92
  %94 = vrot.lane.b32.xlu0 %v18, 15
  %v95 = vpop.permute.xlu0 %94
  %96 = vrot.lane.b32.xlu0 %v19, 15
  %v97 = vpop.permute.xlu0 %96
  %98 = vrot.lane.b32.xlu0 %v20, 15
  %v99 = vpop.permute.xlu0 %98
  %vm100 = vcmp.lt.s32.totalorder %v22, 15
  %v101 = vsel %vm100, %v97, %v99
  %v102 = vsel %vm100, %v95, %v97
  %v103 = vsel %vm100, %v93, %v95
  %v104 = vsel %vm100, %v99, %v93
  %vm105 = vcmp.le.s32.totalorder %v26, 14
  %vm106 = vcmp.le.s32.totalorder %v27, 14
  %vm107 = vcmp.le.s32.totalorder %v28, 14
  %vm108 = vcmp.le.s32.totalorder %v29, 14
  %vm109 = vmand %vm51, %vm105
  %vm110 = vmand %vm52, %vm106
  %vm111 = vmand %vm53, %vm107
  %vm112 = vmand %vm54, %vm108
  %v113 = vsel %vm109, %v104, 0.0
  %v114 = vsel %vm110, %v103, 0.0
  %v115 = vsel %vm111, %v102, 0.0
  %v116 = vsel %vm112, %v101, 0.0
  %117 = vst [vmem:[#allocation2 + $0x40] sm:$0xff] %v113
  %118 = vst [vmem:[#allocation2 + $0x48] sm:$0xff] %v114
  %119 = vst [vmem:[#allocation2 + $0x50] sm:$0xff] %v115
  %120 = vst [vmem:[#allocation2 + $0x58] sm:$0xff] %v116
  %121 = vrot.lane.b32.xlu0 %v17, 1
  %v122 = vpop.permute.xlu0 %121
  %123 = vrot.lane.b32.xlu0 %v18, 1
  %v124 = vpop.permute.xlu0 %123
  %125 = vrot.lane.b32.xlu0 %v19, 1
  %v126 = vpop.permute.xlu0 %125
  %127 = vrot.lane.b32.xlu0 %v20, 1
  %v128 = vpop.permute.xlu0 %127
  %vm129 = vcmp.lt.s32.totalorder %v22, 1
  %v130 = vsel %vm129, %v126, %v128
  %v131 = vsel %vm129, %v124, %v126
  %v132 = vsel %vm129, %v122, %v124
  %v133 = vsel %vm129, %v128, %v122
  %v134 = vsel %vm55, %v133, 0.0
  %v135 = vsel %vm56, %v132, 0.0
  %v136 = vsel %vm57, %v131, 0.0
  %v137 = vsel %vm58, %v130, 0.0
  %138 = vst [vmem:[#allocation2 + $0x60] sm:$0xff] %v134
  %139 = vst [vmem:[#allocation2 + $0x68] sm:$0xff] %v135
  %140 = vst [vmem:[#allocation2 + $0x70] sm:$0xff] %v136
  %141 = vst [vmem:[#allocation2 + $0x78] sm:$0xff] %v137
  %142 = vst [vmem:[#allocation2 + $0x80] sm:$0xff] %v17
  %143 = vst [vmem:[#allocation2 + $0x88] sm:$0xff] %v18
  %144 = vst [vmem:[#allocation2 + $0x90] sm:$0xff] %v19
  %145 = vst [vmem:[#allocation2 + $0x98] sm:$0xff] %v20
  %146 = vrot.lane.b32.xlu0 %v17, 127
  %v147 = vpop.permute.xlu0 %146
  %148 = vrot.lane.b32.xlu0 %v18, 127
  %v149 = vpop.permute.xlu0 %148
  %150 = vrot.lane.b32.xlu0 %v19, 127
  %v151 = vpop.permute.xlu0 %150
  %152 = vrot.lane.b32.xlu0 %v20, 127
  %v153 = vpop.permute.xlu0 %152
  %vm154 = vcmp.lt.s32.totalorder %v22, 127
  %v155 = vsel %vm154, %v151, %v153
  %v156 = vsel %vm154, %v149, %v151
  %v157 = vsel %vm154, %v147, %v149
  %v158 = vsel %vm154, %v153, %v147
  %v159 = vsel %vm105, %v157, 0.0
  %v160 = vsel %vm106, %v156, 0.0
  %v161 = vsel %vm107, %v155, 0.0
  %v162 = vsel %vm108, %v158, 0.0
  %163 = vst [vmem:[#allocation2 + $0xa0] sm:$0xff] %v159
  %164 = vst [vmem:[#allocation2 + $0xa8] sm:$0xff] %v160
  %165 = vst [vmem:[#allocation2 + $0xb0] sm:$0xff] %v161
  %166 = vst [vmem:[#allocation2 + $0xb8] sm:$0xff] %v162
  %167 = vrot.lane.b32.xlu0 %v17, 113
  %v168 = vpop.permute.xlu0 %167
  %169 = vrot.lane.b32.xlu0 %v18, 113
  %v170 = vpop.permute.xlu0 %169
  %171 = vrot.lane.b32.xlu0 %v19, 113
  %v172 = vpop.permute.xlu0 %171
  %173 = vrot.lane.b32.xlu0 %v20, 113
  %v174 = vpop.permute.xlu0 %173
  %vm175 = vcmp.lt.s32.totalorder %v22, 113
  %v176 = vsel %vm175, %v172, %v174
  %v177 = vsel %vm175, %v170, %v172
  %v178 = vsel %vm175, %v168, %v170
  %v179 = vsel %vm175, %v174, %v168
  %vm180 = vcmp.le.s32.totalorder %v34, 14
  %vm181 = vcmp.le.s32.totalorder %v35, 14
  %vm182 = vcmp.le.s32.totalorder %v36, 14
  %vm183 = vcmp.le.s32.totalorder %v37, 14
  %vm184 = vmand %vm180, %vm55
  %vm185 = vmand %vm181, %vm56
  %vm186 = vmand %vm182, %vm57
  %vm187 = vmand %vm183, %vm58
  %v188 = vsel %vm184, %v178, 0.0
  %v189 = vsel %vm185, %v177, 0.0
  %v190 = vsel %vm186, %v176, 0.0
  %v191 = vsel %vm187, %v179, 0.0
  %192 = vst [vmem:[#allocation2 + $0xc0] sm:$0xff] %v188
  %193 = vst [vmem:[#allocation2 + $0xc8] sm:$0xff] %v189
  %194 = vst [vmem:[#allocation2 + $0xd0] sm:$0xff] %v190
  %195 = vst [vmem:[#allocation2 + $0xd8] sm:$0xff] %v191
  %196 = vrot.lane.b32.xlu0 %v17, 112
  %v197 = vpop.permute.xlu0 %196
  %198 = vrot.lane.b32.xlu0 %v18, 112
  %v199 = vpop.permute.xlu0 %198
  %200 = vrot.lane.b32.xlu0 %v19, 112
  %v201 = vpop.permute.xlu0 %200
  %202 = vrot.lane.b32.xlu0 %v20, 112
  %v203 = vpop.permute.xlu0 %202
  %vm204 = vcmp.lt.s32.totalorder %v22, 112
  %v205 = vsel %vm204, %v201, %v203
  %v206 = vsel %vm204, %v199, %v201
  %v207 = vsel %vm204, %v197, %v199
  %v208 = vsel %vm204, %v203, %v197
  %v209 = vsel %vm180, %v207, 0.0
  %v210 = vsel %vm181, %v206, 0.0
  %v211 = vsel %vm182, %v205, 0.0
  %v212 = vsel %vm183, %v208, 0.0
  %213 = vst [vmem:[#allocation2 + $0xe0] sm:$0xff] %v209
  %214 = vst [vmem:[#allocation2 + $0xe8] sm:$0xff] %v210
  %215 = vst [vmem:[#allocation2 + $0xf0] sm:$0xff] %v211
  %216 = vst [vmem:[#allocation2 + $0xf8] sm:$0xff] %v212
  %217 = vrot.lane.b32.xlu0 %v17, 111
  %v218 = vpop.permute.xlu0 %217
  %219 = vrot.lane.b32.xlu0 %v18, 111
  %v220 = vpop.permute.xlu0 %219
  %221 = vrot.lane.b32.xlu0 %v19, 111
  %v222 = vpop.permute.xlu0 %221
  %223 = vrot.lane.b32.xlu0 %v20, 111
  %v224 = vpop.permute.xlu0 %223
  %vm225 = vcmp.lt.s32.totalorder %v22, 111
  %v226 = vsel %vm225, %v222, %v224
  %v227 = vsel %vm225, %v220, %v222
  %v228 = vsel %vm225, %v218, %v220
  %v229 = vsel %vm225, %v224, %v218
  %vm230 = vmand %vm180, %vm105
  %vm231 = vmand %vm181, %vm106
  %vm232 = vmand %vm182, %vm107
  %vm233 = vmand %vm183, %vm108
  %v234 = vsel %vm230, %v228, 0.0
  %v235 = vsel %vm231, %v227, 0.0
  %v236 = vsel %vm232, %v226, 0.0
  %v237 = vsel %vm233, %v229, 0.0
  %238 = vst [vmem:[#allocation2 + $0x100] sm:$0xff] %v234
  %239 = vst [vmem:[#allocation2 + $0x108] sm:$0xff] %v235
  %240 = vst [vmem:[#allocation2 + $0x110] sm:$0xff] %v236
  %241 = vst [vmem:[#allocation2 + $0x118] sm:$0xff] %v237
  %v242 = vld [vmem:[%s1] sm:$0xff]
  %v243 = vld [vmem:[#allocation2] sm:$0xff]
  %v244 = vld [vmem:[#allocation2 + $0x8] sm:$0xff]
  %v245 = vld [vmem:[#allocation2 + $0x10] sm:$0xff]
  %v246 = vld [vmem:[#allocation2 + $0x18] sm:$0xff]
  %v247 = vld [vmem:[#allocation2 + $0x20] sm:$0xff]
  %v248 = vld [vmem:[#allocation2 + $0x28] sm:$0xff]
  %v249 = vld [vmem:[#allocation2 + $0x30] sm:$0xff]
  %v250 = vld [vmem:[#allocation2 + $0x38] sm:$0xff]
  %v251 = vld [vmem:[#allocation2 + $0x40] sm:$0xff]
  %v252 = vld [vmem:[#allocation2 + $0x48] sm:$0xff]
  %v253 = vld [vmem:[#allocation2 + $0x50] sm:$0xff]
  %v254 = vld [vmem:[#allocation2 + $0x58] sm:$0xff]
  %v255 = vld [vmem:[#allocation2 + $0x60] sm:$0xff]
  %v256 = vld [vmem:[#allocation2 + $0x68] sm:$0xff]
  %v257 = vld [vmem:[#allocation2 + $0x70] sm:$0xff]
  %v258 = vld [vmem:[#allocation2 + $0x78] sm:$0xff]
  %v259 = vld [vmem:[#allocation2 + $0x80] sm:$0xff]
  %v260 = vld [vmem:[#allocation2 + $0x88] sm:$0xff]
  %v261 = vld [vmem:[#allocation2 + $0x90] sm:$0xff]
  %v262 = vld [vmem:[#allocation2 + $0x98] sm:$0xff]
  %v263 = vld [vmem:[#allocation2 + $0xa0] sm:$0xff]
  %v264 = vld [vmem:[#allocation2 + $0xa8] sm:$0xff]
  %v265 = vld [vmem:[#allocation2 + $0xb0] sm:$0xff]
  %v266 = vld [vmem:[#allocation2 + $0xb8] sm:$0xff]
  %v267 = vld [vmem:[#allocation2 + $0xc0] sm:$0xff]
  %v268 = vld [vmem:[#allocation2 + $0xc8] sm:$0xff]
  %v269 = vld [vmem:[#allocation2 + $0xd0] sm:$0xff]
  %v270 = vld [vmem:[#allocation2 + $0xd8] sm:$0xff]
  %v271 = vld [vmem:[#allocation2 + $0xe0] sm:$0xff]
  %v272 = vld [vmem:[#allocation2 + $0xe8] sm:$0xff]
  %v273 = vld [vmem:[#allocation2 + $0xf0] sm:$0xff]
  %v274 = vld [vmem:[#allocation2 + $0xf8] sm:$0xff]
  %v275 = vld [vmem:[#allocation2 + $0x100] sm:$0xff]
  %v276 = vld [vmem:[#allocation2 + $0x108] sm:$0xff]
  %v277 = vld [vmem:[#allocation2 + $0x110] sm:$0xff]
  %v278 = vld [vmem:[#allocation2 + $0x118] sm:$0xff]
  %vm279 = vcmask 588800
  %v281 = vsel %vm279, %v242, 0
  %283 = vmatpush.msra.mxu0 0.0
  %284 = vmatpush.msra.mxu0 0.0
  %285 = vmatpush.msra.mxu0 0.0
  %286 = vmatpush.msra.mxu0 0.0
  %287 = vmatpush.msra.mxu0 0.0
  %288 = vmatpush.msra.mxu0 0.0
  %289 = vmatpush.msra.mxu0 0.0
  %290 = vmatpush.msra.mxu0 %v275
  %291 = vmatpush.msra.mxu0 %v271
  %292 = vmatpush.msra.mxu0 %v267
  %293 = vmatpush.msra.mxu0 %v263
  %294 = vmatpush.msra.mxu0 %v259
  %295 = vmatpush.msra.mxu0 %v255
  %296 = vmatpush.msra.mxu0 %v251
  %297 = vmatpush.msra.mxu0 %v247
  %298 = vmatpush.msra.mxu0 %v243
  %299 = vmatmul.f32.gmra.mxu0 %v281
  %v300 = vpop.f32.mrf.mxu0
  %v301 = vadd.f32 0.0, %v300
  %302 = vdwg.mxu0
  %303 = vmatpush.msra.mxu0 0.0
  %304 = vmatpush.msra.mxu0 0.0
  %305 = vmatpush.msra.mxu0 0.0
  %306 = vmatpush.msra.mxu0 0.0
  %307 = vmatpush.msra.mxu0 0.0
  %308 = vmatpush.msra.mxu0 0.0
  %309 = vmatpush.msra.mxu0 0.0
  %310 = vmatpush.msra.mxu0 %v276
  %311 = vmatpush.msra.mxu0 %v272
  %312 = vmatpush.msra.mxu0 %v268
  %313 = vmatpush.msra.mxu0 %v264
  %314 = vmatpush.msra.mxu0 %v260
  %315 = vmatpush.msra.mxu0 %v256
  %316 = vmatpush.msra.mxu0 %v252
  %317 = vmatpush.msra.mxu0 %v248
  %318 = vmatpush.msra.mxu0 %v244
  %319 = vmatmul.f32.gmra.mxu0 %v281
  %v320 = vpop.f32.mrf.mxu0
  %v321 = vadd.f32 0.0, %v320
  %322 = vdwg.mxu0
  %323 = vmatpush.msra.mxu0 0.0
  %324 = vmatpush.msra.mxu0 0.0
  %325 = vmatpush.msra.mxu0 0.0
  %326 = vmatpush.msra.mxu0 0.0
  %327 = vmatpush.msra.mxu0 0.0
  %328 = vmatpush.msra.mxu0 0.0
  %329 = vmatpush.msra.mxu0 0.0
  %330 = vmatpush.msra.mxu0 %v277
  %331 = vmatpush.msra.mxu0 %v273
  %332 = vmatpush.msra.mxu0 %v269
  %333 = vmatpush.msra.mxu0 %v265
  %334 = vmatpush.msra.mxu0 %v261
  %335 = vmatpush.msra.mxu0 %v257
  %336 = vmatpush.msra.mxu0 %v253
  %337 = vmatpush.msra.mxu0 %v249
  %338 = vmatpush.msra.mxu0 %v245
  %339 = vmatmul.f32.gmra.mxu0 %v281
  %v340 = vpop.f32.mrf.mxu0
  %v341 = vadd.f32 0.0, %v340
  %342 = vdwg.mxu0
  %343 = vmatpush.msra.mxu0 0.0
  %344 = vmatpush.msra.mxu0 0.0
  %345 = vmatpush.msra.mxu0 0.0
  %346 = vmatpush.msra.mxu0 0.0
  %347 = vmatpush.msra.mxu0 0.0
  %348 = vmatpush.msra.mxu0 0.0
  %349 = vmatpush.msra.mxu0 0.0
  %350 = vmatpush.msra.mxu0 %v278
  %351 = vmatpush.msra.mxu0 %v274
  %352 = vmatpush.msra.mxu0 %v270
  %353 = vmatpush.msra.mxu0 %v266
  %354 = vmatpush.msra.mxu0 %v262
  %355 = vmatpush.msra.mxu0 %v258
  %356 = vmatpush.msra.mxu0 %v254
  %357 = vmatpush.msra.mxu0 %v250
  %358 = vmatpush.msra.mxu0 %v246
  %359 = vmatmul.f32.gmra.mxu0 %v281
  %v360 = vpop.f32.mrf.mxu0
  %v361 = vadd.f32 0.0, %v360
  %362 = vdwg.mxu0
  %v363 = vadd.f32 %v301, %v321
  %v364 = vadd.f32 %v363, %v341
  %v365 = vadd.f32 %v364, %v361
  %366 = vadd.xlane.f32.xlu0 %v365
  %v367 = vpop.xlane.xlu0 %366
  %v368 = vmul.f32 %v301, %v301
  %v369 = vmul.f32 %v321, %v321
  %v370 = vmul.f32 %v341, %v341
  %v371 = vmul.f32 %v361, %v361
  %v372 = vadd.f32 %v368, %v369
  %v373 = vadd.f32 %v372, %v370
  %v374 = vadd.f32 %v373, %v371
  %375 = vadd.xlane.f32.xlu0 %v374
  %v376 = vpop.xlane.xlu0 %375
  %v377 = vmul.f32 %v367, 0.001953125
  %v378 = vmul.f32 %v376, 0.001953125
  %v379 = vmul.f32 %v377, %v377
  %v380 = vsub.f32 %v378, %v379
  %v381 = vld [vmem:[%s2] sm:$0xff]
  %v382 = vadd.f32 %v380, 1e-05
  %v383 = vrsqrt.pop %v382
  %v384 = vmul.f32 %v383, %v382
  %v385 = vmul.f32 %v384, %v383
  %v386 = vmul.f32 0.5, %v385
  %v387 = vsub.f32 1.5, %v386
  %v388 = vmul.f32 %v383, %v387
  %vm389 = vweird.f32 %v382
  %vm390 = vweird.f32 %v383
  %vm391 = vmor %vm389, %vm390
  %v392 = vsel %vm391, %v383, %v388
  %v393 = vmul.f32 %v381, %v392
  %v394 = vld [vmem:[%s3] sm:$0xff]
  %v395 = vmul.f32 %v377, %v393
  %v396 = vsub.f32 %v394, %v395
  %398 = vset.pattern.permute.xlu0 0
  %399 = vperm.xlu0 %398, %v393
  %v400 = vpop.permute.xlu0 %399
  %v402 = vmul.f32 %v301, %v400
  %v403 = vmul.f32 %v321, %v400
  %v404 = vmul.f32 %v341, %v400
  %v405 = vmul.f32 %v361, %v400
  %407 = vset.pattern.permute.xlu0 0
  %408 = vperm.xlu0 %407, %v396
  %v409 = vpop.permute.xlu0 %408
  %v411 = vadd.f32 %v402, %v409
  %v412 = vadd.f32 %v403, %v409
  %v413 = vadd.f32 %v404, %v409
  %v414 = vadd.f32 %v405, %v409
  %vm415 = vcmp.gt.f32.partialorder %v411, 0.0
  %vm416 = vcmp.gt.f32.partialorder %v412, 0.0
  %vm417 = vcmp.gt.f32.partialorder %v413, 0.0
  %vm418 = vcmp.gt.f32.partialorder %v414, 0.0
  %v419 = vmul.f32 %v411, 0.2
  %v420 = vmul.f32 %v412, 0.2
  %v421 = vmul.f32 %v413, 0.2
  %v422 = vmul.f32 %v414, 0.2
  %v423 = vsel %vm415, %v411, %v419
  %v424 = vsel %vm416, %v412, %v420
  %v425 = vsel %vm417, %v413, %v421
  %v426 = vsel %vm418, %v414, %v422
  %427 = vst [vmem:[%s4] sm:$0xff] %v423
  %428 = vst [vmem:[%s4 + $0x8] sm:$0xff] %v424
  %429 = vst [vmem:[%s4 + $0x10] sm:$0xff] %v425
  %430 = vst [vmem:[%s4 + $0x18] sm:$0xff] %v426
  // Predicated region
  $region18: #{cnn_layer_forward.1} parent=0 // pred_check
    _
  $region19: #{cnn_layer_forward.1} parent=0 // pred_check_branch
    %432 = sbr.rel (0) target = $region21
  $region20: #{cnn_layer_forward.1} parent=0 // pred_region
    _
  $region21: #{cnn_layer_forward.1} parent=0 // pred_fallthru
    _
  // Predicated region
  $region22: #{cnn_layer_forward.1} parent=0 // pred_check
    _
  $region23: #{cnn_layer_forward.1} parent=0 // pred_check_branch
    %434 = sbr.rel (0) target = $region25
  $region24: #{cnn_layer_forward.1} parent=0 // pred_region
    _
  $region25: #{cnn_layer_forward.1} parent=0 // pred_fallthru
    _

</llo_original>
